<compile_context>
chip_gen: v7x
topology: tpu7x:2x2x1
jax: 0.10.0
libtpu: 0.0.40
codegen_flags: <defaults>
</compile_context>

<pallas_src>
import functools

import jax
import jax.numpy as jnp
from jax.experimental import pallas as pl
from jax.experimental.pallas import tpu as pltpu


def _round_up(x, m):
    return ((x + m - 1) // m) * m


# --------------------------------------------------------------------------- #
# Fused kernel: packed set branches + flow MLP + output head, one batch tile.  #
# --------------------------------------------------------------------------- #
def _setconv_kernel(x_ref, pw_ref, w_ref, b_ref, out_ref, *, hid_units, w1_rows):
    h = hid_units
    h4 = 4 * h
    r1 = w1_rows
    bt, n, f = x_ref.shape                      # f == r1 (padded feature dim)

    # Static slices of the resident weight / bias slabs (free).
    w1 = w_ref[0:r1, 0:h4]                      # block-diag [sw1|pw1|jw1|fw1]
    w2 = w_ref[r1:r1 + h4, 0:h4]                # block-diag [sw2|pw2|jw2|fw2]
    ow1 = w_ref[r1:r1 + h4, h4:h4 + h]          # out_mlp1
    b1 = b_ref[0:1, :]                          # (1, 4H)
    b2 = b_ref[1:2, :]                          # (1, 4H)
    ob1 = b_ref[2:3, 0:h]                       # (1, H)
    ow2 = b_ref[3:4, 0:h]                       # (1, H)  (out_mlp2 weight as a row)
    ob2 = b_ref[4:5, 0:1]                       # (1, 1)

    # All branches at once: one big (Bt*N, F) x (F, 4H) matmul per layer.
    # N is a multiple of 8 so these reshapes are tile-aligned no-ops.
    x = x_ref[...].reshape(bt * n, f)
    y = jnp.dot(x, w1, preferred_element_type=jnp.float32) + b1
    y = jnp.maximum(y, 0.0)
    y = jnp.dot(y, w2, preferred_element_type=jnp.float32) + b2
    y = jnp.maximum(y, 0.0)
    y = y.reshape(bt, n, h4)

    # Masked mean-pool each set branch with wrapper-prescaled weights (mask/count).
    pwe = pw_ref[...][:, :, None]               # (Bt, 3N, 1)
    pooled = []
    for c in range(3):
        wc3 = pwe[:, c * n:(c + 1) * n, :]      # (Bt, N, 1)
        yc = y[:, :, c * h:(c + 1) * h]         # (Bt, N, H)
        pooled.append(jnp.sum(yc * wc3, axis=1))            # (Bt, H)
    # Flow branch: set-member 0 carries the real flow features -> just take member 0.
    pooled.append(jnp.sum(y[:, 0:1, 3 * h:4 * h], axis=1))  # (Bt, H)
    hid = jnp.concatenate(pooled, axis=-1)      # (Bt, 4H) == [hs|hp|hj|hf]

    hid = jnp.dot(hid, ow1, preferred_element_type=jnp.float32) + ob1
    hid = jnp.maximum(hid, 0.0)

    # Final layer as a VPU mul + lane reduce; store lane-dense (batch on lanes).
    logit = jnp.sum(hid * ow2, axis=1)          # (Bt,)
    logit = logit[None, :] + ob2                # (1, Bt)
    out_ref[...] = jax.nn.sigmoid(logit)[None, :, :]


# --------------------------------------------------------------------------- #
# One-time parameter packing: block-diagonal weight slab + bias slab.          #
# --------------------------------------------------------------------------- #
def pack_setconv_params(p):
    H = p["sw1"].shape[1]
    h4 = 4 * H
    w1_list = [p["sw1"], p["pw1"], p["jw1"], p["fw1"]]
    Ftot = sum(w.shape[0] for w in w1_list)
    Fpad = _round_up(Ftot, 8)

    # Layer-1 block-diagonal (Fpad, 4H).
    w1 = jnp.zeros((Fpad, h4), jnp.float32)
    off = 0
    for i, w in enumerate(w1_list):
        w1 = w1.at[off:off + w.shape[0], i * H:(i + 1) * H].set(w)
        off += w.shape[0]
    b1 = jnp.concatenate([p["sb1"], p["pb1"], p["jb1"], p["fb1"]], axis=1)

    # Layer-2 block-diagonal (4H, 4H).
    w2 = jnp.zeros((h4, h4), jnp.float32)
    for i, w in enumerate([p["sw2"], p["pw2"], p["jw2"], p["fw2"]]):
        w2 = w2.at[i * H:(i + 1) * H, i * H:(i + 1) * H].set(w)
    b2 = jnp.concatenate([p["sb2"], p["pb2"], p["jb2"], p["fb2"]], axis=1)

    # Single weight slab: rows [0:Fpad] = W1, rows [Fpad:Fpad+4H] = [W2 | out_mlp1].
    w_slab = jnp.zeros((Fpad + h4, 5 * H), jnp.float32)
    w_slab = w_slab.at[0:Fpad, 0:h4].set(w1)
    w_slab = w_slab.at[Fpad:Fpad + h4, 0:h4].set(w2)
    w_slab = w_slab.at[Fpad:Fpad + h4, h4:h4 + H].set(p["ow1"])

    # Single bias slab (5, 4H): b1, b2, out_b1, out_w2 (as a row), out_b2.
    b_slab = jnp.zeros((5, h4), jnp.float32)
    b_slab = b_slab.at[0].set(b1[0])
    b_slab = b_slab.at[1].set(b2[0])
    b_slab = b_slab.at[2, 0:H].set(p["ob1"][0])
    b_slab = b_slab.at[3, 0:H].set(p["ow2"][:, 0])
    b_slab = b_slab.at[4, 0].set(p["ob2"][0, 0])
    return {"w": w_slab, "b": b_slab}


# --------------------------------------------------------------------------- #
# Wrapper: input packing, batch tiling, pallas_call.                           #
# --------------------------------------------------------------------------- #
@functools.partial(jax.jit, static_argnames=("block_b",))
def setconv_forward(packed, samples, predicates, joins, flows,
                    sample_mask, predicate_mask, join_mask, *, block_b=1024):
    w_slab, b_slab = packed["w"], packed["b"]
    B, Ns, Fs = samples.shape
    _, Npred, Fp = predicates.shape
    _, Nj, Fj = joins.shape
    Ff = flows.shape[1]
    H = b_slab.shape[1] // 4
    Fpad = w_slab.shape[0] - 4 * H
    Ftot = Fs + Fp + Fj + Ff
    Npad = _round_up(max(Ns, Npred, Nj, 1), 8)

    # ---- packed per-member activations (B, Npad, Fpad) -------------------- #
    def pad_set(x):
        return jnp.pad(x, ((0, 0), (0, Npad - x.shape[1]), (0, 0)))

    flows3 = jnp.pad(flows[:, None, :], ((0, 0), (0, Npad - 1), (0, 0)))
    x = jnp.concatenate(
        [pad_set(samples), pad_set(predicates), pad_set(joins), flows3], axis=2)
    x = jnp.pad(x, ((0, 0), (0, 0), (0, Fpad - Ftot)))

    # ---- pooling weights: exact mask/count, lane-packed (B, 3*Npad) ------- #
    def pool_w(mask):
        m = mask[..., 0] if mask.ndim == 3 else mask          # (B, n)
        cnt = jnp.sum(m, axis=1, keepdims=True)               # (B, 1)
        w = m / cnt
        return jnp.pad(w, ((0, 0), (0, Npad - m.shape[1])))

    pw = jnp.concatenate(
        [pool_w(sample_mask), pool_w(predicate_mask), pool_w(join_mask)], axis=1)

    # ---- batch tiling ------------------------------------------------------ #
    b8 = _round_up(B, 8)
    if b8 >= 256:
        # Large batch: cap the tile and keep >=2 grid steps (v7x megacore sharding).
        Bt = min(block_b, _round_up((b8 + 1) // 2, 8))
    else:
        Bt = b8
    Bp = _round_up(B, Bt)
    G = Bp // Bt

    def pad_b(a):
        if Bp == B:
            return a
        return jnp.pad(a, ((0, Bp - B),) + ((0, 0),) * (a.ndim - 1))

    x = pad_b(x)
    pw = pad_b(pw)          # padded rows get zero pooling weights (no 0/0, no NaN)

    kernel = functools.partial(_setconv_kernel, hid_units=H, w1_rows=Fpad)

    out = pl.pallas_call(
        kernel,
        out_shape=jax.ShapeDtypeStruct((G, 1, Bt), jnp.float32),
        grid=(G,),
        in_specs=[
            pl.BlockSpec((Bt, Npad, Fpad), lambda i: (i, 0, 0)),
            pl.BlockSpec((Bt, 3 * Npad), lambda i: (i, 0)),
            pl.BlockSpec(w_slab.shape, lambda i: (0, 0)),
            pl.BlockSpec(b_slab.shape, lambda i: (0, 0)),
        ],
        out_specs=pl.BlockSpec((1, 1, Bt), lambda i: (i, 0, 0)),
        compiler_params=pltpu.CompilerParams(
            dimension_semantics=("parallel",),
            vmem_limit_bytes=48 * 1024 * 1024,
        ),
    )(x, pw, w_slab, b_slab)

    return out.reshape(Bp, 1)[:B]


# --------------------------------------------------------------------------- #
# Pure-JAX reference (matches the PyTorch SetConv.forward semantics).          #
# --------------------------------------------------------------------------- #
def setconv_reference(params, samples, predicates, joins, flows,
                      sample_mask, predicate_mask, join_mask):
    p = params
    hp = jax.lax.Precision.HIGHEST

    def branch(x, mask, w1, b1, w2, b2):
        h = jax.nn.relu(jnp.dot(x, w1, precision=hp) + b1)
        h = jax.nn.relu(jnp.dot(h, w2, precision=hp) + b2)
        h = h * mask
        h = jnp.sum(h, axis=1)
        norm = jnp.sum(mask, axis=1)
        return h / norm

    hs = branch(samples, sample_mask, p["sw1"], p["sb1"], p["sw2"], p["sb2"])
    hpred = branch(predicates, predicate_mask, p["pw1"], p["pb1"], p["pw2"], p["pb2"])
    hj = branch(joins, join_mask, p["jw1"], p["jb1"], p["jw2"], p["jb2"])
    hf = jax.nn.relu(jnp.dot(flows, p["fw1"], precision=hp) + p["fb1"])
    hf = jax.nn.relu(jnp.dot(hf, p["fw2"], precision=hp) + p["fb2"])
    hid = jnp.concatenate([hs, hpred, hj, hf], axis=1)
    hid = jax.nn.relu(jnp.dot(hid, p["ow1"], precision=hp) + p["ob1"])
    return jax.nn.sigmoid(jnp.dot(hid, p["ow2"], precision=hp) + p["ob2"])


def init_params(key, sample_feats, predicate_feats, join_feats, flow_feats, H):
    keys = jax.random.split(key, 10)

    def lin(k, fan_in, fan_out):
        kw, kb = jax.random.split(k)
        w = jax.random.normal(kw, (fan_in, fan_out), jnp.float32) * 0.1
        b = jax.random.normal(kb, (1, fan_out), jnp.float32) * 0.1
        return w, b

    p = {}
    p["sw1"], p["sb1"] = lin(keys[0], sample_feats, H)
    p["sw2"], p["sb2"] = lin(keys[1], H, H)
    p["pw1"], p["pb1"] = lin(keys[2], predicate_feats, H)
    p["pw2"], p["pb2"] = lin(keys[3], H, H)
    p["jw1"], p["jb1"] = lin(keys[4], join_feats, H)
    p["jw2"], p["jb2"] = lin(keys[5], H, H)
    p["fw1"], p["fb1"] = lin(keys[6], flow_feats, H)
    p["fw2"], p["fb2"] = lin(keys[7], H, H)
    p["ow1"], p["ob1"] = lin(keys[8], 4 * H, H)
    p["ow2"], p["ob2"] = lin(keys[9], H, 1)
    return p


if __name__ == "__main__":
    B = 2
    Ns, Np_, Nj = 8, 6, 4
    sample_feats, predicate_feats, join_feats, flow_feats = 16, 12, 8, 6
    H = 32

    key = jax.random.PRNGKey(0)
    k = jax.random.split(key, 8)

    params = init_params(k[0], sample_feats, predicate_feats, join_feats,
                         flow_feats, H)
    packed = pack_setconv_params(params)

    samples = jax.random.normal(k[1], (B, Ns, sample_feats), jnp.float32)
    predicates = jax.random.normal(k[2], (B, Np_, predicate_feats), jnp.float32)
    joins = jax.random.normal(k[3], (B, Nj, join_feats), jnp.float32)
    flows = jax.random.normal(k[4], (B, flow_feats), jnp.float32)

    # masks: 1.0 for valid set members, 0.0 for padding (at least one valid each)
    def make_mask(n, valid_counts):
        rows = jnp.arange(n)[None, :, None]                     # (1, N, 1)
        counts = jnp.asarray(valid_counts, jnp.int32)[:, None, None]
        return (rows < counts).astype(jnp.float32)               # (B, N, 1)

    sample_mask = make_mask(Ns, [Ns, 5])
    predicate_mask = make_mask(Np_, [3, Np_])
    join_mask = make_mask(Nj, [2, 3])

    out = setconv_forward(packed, samples, predicates, joins, flows,
                          sample_mask, predicate_mask, join_mask)
    out = jax.block_until_ready(out)

    ref = setconv_reference(params, samples, predicates, joins, flows,
                            sample_mask, predicate_mask, join_mask)

    assert out.shape == (B, 1), out.shape
    assert jnp.allclose(out, ref, atol=1e-4, rtol=1e-4), (out, ref)
    print("KERNEL_OK")
</pallas_src>

<mosaic_0001>
module attributes {stable_mosaic.version = 11 : i64} {
  func.func @_setconv_kernel(%arg0: i32, %arg1: memref<8x8x48xf32, #tpu.memory_space<vmem>>, %arg2: memref<8x24xf32, #tpu.memory_space<vmem>>, %arg3: memref<176x160xf32, #tpu.memory_space<vmem>>, %arg4: memref<5x128xf32, #tpu.memory_space<vmem>>, %arg5: memref<1x1x8xf32, #tpu.memory_space<vmem>>) attributes {dimension_semantics = [#tpu.dimension_semantics<parallel>], iteration_bounds = array<i64: 1>, scalar_prefetch = 0 : i64, scratch_operands = 0 : i64, tpu.core_type = #tpu.core_type<tc>, window_params = [{transform_indices = @transform_0, window_bounds = array<i64: 8, 8, 48>}, {transform_indices = @transform_1, window_bounds = array<i64: 8, 24>}, {pipeline_mode = #tpu.pipeline_mode<synchronous>, transform_indices = @transform_2, window_bounds = array<i64: 176, 160>}, {pipeline_mode = #tpu.pipeline_mode<synchronous>, transform_indices = @transform_3, window_bounds = array<i64: 5, 128>}, {transform_indices = @transform_4, window_bounds = array<i64: 1, 1, 8>}]} {
    %c0 = arith.constant 0 : index
    %c0_0 = arith.constant 0 : index
    %0 = vector.load %arg3[%c0, %c0_0] : memref<176x160xf32, #tpu.memory_space<vmem>>, vector<48x128xf32>
    %c48 = arith.constant 48 : index
    %c0_1 = arith.constant 0 : index
    %1 = vector.load %arg3[%c48, %c0_1] : memref<176x160xf32, #tpu.memory_space<vmem>>, vector<128x128xf32>
    %c48_2 = arith.constant 48 : index
    %c128 = arith.constant 128 : index
    %2 = vector.load %arg3[%c48_2, %c128] : memref<176x160xf32, #tpu.memory_space<vmem>>, vector<128x32xf32>
    %c0_3 = arith.constant 0 : index
    %c0_4 = arith.constant 0 : index
    %3 = vector.load %arg4[%c0_3, %c0_4] : memref<5x128xf32, #tpu.memory_space<vmem>>, vector<1x128xf32>
    %c1 = arith.constant 1 : index
    %c0_5 = arith.constant 0 : index
    %4 = vector.load %arg4[%c1, %c0_5] : memref<5x128xf32, #tpu.memory_space<vmem>>, vector<1x128xf32>
    %c2 = arith.constant 2 : index
    %c0_6 = arith.constant 0 : index
    %5 = vector.load %arg4[%c2, %c0_6] : memref<5x128xf32, #tpu.memory_space<vmem>>, vector<1x32xf32>
    %c3 = arith.constant 3 : index
    %c0_7 = arith.constant 0 : index
    %6 = vector.load %arg4[%c3, %c0_7] : memref<5x128xf32, #tpu.memory_space<vmem>>, vector<1x32xf32>
    %c4 = arith.constant 4 : index
    %c0_8 = arith.constant 0 : index
    %7 = vector.load %arg4[%c4, %c0_8] : memref<5x128xf32, #tpu.memory_space<vmem>>, vector<1x1xf32>
    %c0_9 = arith.constant 0 : index
    %c0_10 = arith.constant 0 : index
    %c0_11 = arith.constant 0 : index
    %8 = vector.load %arg1[%c0_9, %c0_10, %c0_11] : memref<8x8x48xf32, #tpu.memory_space<vmem>>, vector<8x8x48xf32>
    %9 = vector.shape_cast %8 : vector<8x8x48xf32> to vector<64x48xf32>
    %cst = arith.constant dense<0.000000e+00> : vector<64x128xf32>
    %10 = tpu.matmul %9, %0, %cst {dimension_numbers = #tpu.dot_dimension_numbers<[1], [0], [0], [1], [0, 0, 1, 1], [], []>} : vector<64x48xf32>, vector<48x128xf32>, vector<64x128xf32> -> vector<64x128xf32>
    %11 = vector.broadcast %3 : vector<1x128xf32> to vector<64x128xf32>
    %12 = arith.addf %10, %11 : vector<64x128xf32>
    %cst_12 = arith.constant 0.000000e+00 : f32
    %13 = vector.broadcast %cst_12 : f32 to vector<64x128xf32>
    %14 = arith.maximumf %12, %13 : vector<64x128xf32>
    %cst_13 = arith.constant dense<0.000000e+00> : vector<64x128xf32>
    %15 = tpu.matmul %14, %1, %cst_13 {dimension_numbers = #tpu.dot_dimension_numbers<[1], [0], [0], [1], [0, 0, 1, 1], [], []>} : vector<64x128xf32>, vector<128x128xf32>, vector<64x128xf32> -> vector<64x128xf32>
    %16 = vector.broadcast %4 : vector<1x128xf32> to vector<64x128xf32>
    %17 = arith.addf %15, %16 : vector<64x128xf32>
    %cst_14 = arith.constant 0.000000e+00 : f32
    %18 = vector.broadcast %cst_14 : f32 to vector<64x128xf32>
    %19 = arith.maximumf %17, %18 : vector<64x128xf32>
    %20 = vector.shape_cast %19 : vector<64x128xf32> to vector<8x8x128xf32>
    %c0_15 = arith.constant 0 : index
    %c0_16 = arith.constant 0 : index
    %21 = vector.load %arg2[%c0_15, %c0_16] : memref<8x24xf32, #tpu.memory_space<vmem>>, vector<8x24xf32>
    %22 = vector.shape_cast %21 : vector<8x24xf32> to vector<8x24x1xf32>
    %23 = vector.extract_strided_slice %22 {offsets = [0, 0, 0], sizes = [8, 8, 1], strides = [1, 1, 1]} : vector<8x24x1xf32> to vector<8x8x1xf32>
    %24 = vector.extract_strided_slice %20 {offsets = [0, 0, 0], sizes = [8, 8, 32], strides = [1, 1, 1]} : vector<8x8x128xf32> to vector<8x8x32xf32>
    %25 = vector.broadcast %23 : vector<8x8x1xf32> to vector<8x8x32xf32>
    %26 = arith.mulf %24, %25 : vector<8x8x32xf32>
    %cst_17 = arith.constant dense<0.000000e+00> : vector<8x32xf32>
    %27 = vector.multi_reduction <add>, %26, %cst_17 [1] : vector<8x8x32xf32> to vector<8x32xf32>
    %28 = vector.extract_strided_slice %22 {offsets = [0, 8, 0], sizes = [8, 8, 1], strides = [1, 1, 1]} : vector<8x24x1xf32> to vector<8x8x1xf32>
    %29 = vector.extract_strided_slice %20 {offsets = [0, 0, 32], sizes = [8, 8, 32], strides = [1, 1, 1]} : vector<8x8x128xf32> to vector<8x8x32xf32>
    %30 = vector.broadcast %28 : vector<8x8x1xf32> to vector<8x8x32xf32>
    %31 = arith.mulf %29, %30 : vector<8x8x32xf32>
    %cst_18 = arith.constant dense<0.000000e+00> : vector<8x32xf32>
    %32 = vector.multi_reduction <add>, %31, %cst_18 [1] : vector<8x8x32xf32> to vector<8x32xf32>
    %33 = vector.extract_strided_slice %22 {offsets = [0, 16, 0], sizes = [8, 8, 1], strides = [1, 1, 1]} : vector<8x24x1xf32> to vector<8x8x1xf32>
    %34 = vector.extract_strided_slice %20 {offsets = [0, 0, 64], sizes = [8, 8, 32], strides = [1, 1, 1]} : vector<8x8x128xf32> to vector<8x8x32xf32>
    %35 = vector.broadcast %33 : vector<8x8x1xf32> to vector<8x8x32xf32>
    %36 = arith.mulf %34, %35 : vector<8x8x32xf32>
    %cst_19 = arith.constant dense<0.000000e+00> : vector<8x32xf32>
    %37 = vector.multi_reduction <add>, %36, %cst_19 [1] : vector<8x8x32xf32> to vector<8x32xf32>
    %38 = vector.extract_strided_slice %20 {offsets = [0, 0, 96], sizes = [8, 1, 32], strides = [1, 1, 1]} : vector<8x8x128xf32> to vector<8x1x32xf32>
    %cst_20 = arith.constant dense<0.000000e+00> : vector<8x32xf32>
    %39 = vector.multi_reduction <add>, %38, %cst_20 [1] : vector<8x1x32xf32> to vector<8x32xf32>
    %40 = tpu.concatenate %27, %32, %37, %39 in 1 : vector<8x32xf32>, vector<8x32xf32>, vector<8x32xf32>, vector<8x32xf32> -> vector<8x128xf32>
    %cst_21 = arith.constant dense<0.000000e+00> : vector<8x32xf32>
    %41 = tpu.matmul %40, %2, %cst_21 {dimension_numbers = #tpu.dot_dimension_numbers<[1], [0], [0], [1], [0, 0, 1, 1], [], []>} : vector<8x128xf32>, vector<128x32xf32>, vector<8x32xf32> -> vector<8x32xf32>
    %42 = vector.broadcast %5 : vector<1x32xf32> to vector<8x32xf32>
    %43 = arith.addf %41, %42 : vector<8x32xf32>
    %cst_22 = arith.constant 0.000000e+00 : f32
    %44 = vector.broadcast %cst_22 : f32 to vector<8x32xf32>
    %45 = arith.maximumf %43, %44 : vector<8x32xf32>
    %46 = vector.broadcast %6 : vector<1x32xf32> to vector<8x32xf32>
    %47 = arith.mulf %45, %46 : vector<8x32xf32>
    %cst_23 = arith.constant dense<0.000000e+00> : vector<8xf32>
    %48 = vector.multi_reduction <add>, %47, %cst_23 [1] : vector<8x32xf32> to vector<8xf32>
    %49 = vector.shape_cast %48 : vector<8xf32> to vector<1x8xf32>
    %50 = vector.broadcast %7 : vector<1x1xf32> to vector<1x8xf32>
    %51 = arith.addf %49, %50 : vector<1x8xf32>
    %52 = arith.negf %51 : vector<1x8xf32>
    %53 = math.exp %52 : vector<1x8xf32>
    %cst_24 = arith.constant 1.000000e+00 : f32
    %54 = vector.broadcast %cst_24 : f32 to vector<1x8xf32>
    %55 = arith.addf %54, %53 : vector<1x8xf32>
    %56 = arith.divf %54, %55 : vector<1x8xf32>
    %57 = vector.shape_cast %56 : vector<1x8xf32> to vector<1x1x8xf32>
    %c0_25 = arith.constant 0 : index
    %c0_26 = arith.constant 0 : index
    %c0_27 = arith.constant 0 : index
    %58 = vector.load %arg5[%c0_25, %c0_26, %c0_27] : memref<1x1x8xf32, #tpu.memory_space<vmem>>, vector<1x1x8xf32>
    tpu.vector_store %arg5[%c0_25, %c0_26, %c0_27], %57 {strides = array<i32>} : memref<1x1x8xf32, #tpu.memory_space<vmem>>, vector<1x1x8xf32>,
    return
  }
  func.func @transform_0(%arg0: i32) -> (i32, i32, i32) {
    %c0_i32 = arith.constant 0 : i32
    %c0_i32_0 = arith.constant 0 : i32
    %c0_i32_1 = arith.constant 0 : i32
    return %arg0, %c0_i32, %c0_i32_0 : i32, i32, i32
  }
  func.func @transform_1(%arg0: i32) -> (i32, i32) {
    %c0_i32 = arith.constant 0 : i32
    %c0_i32_0 = arith.constant 0 : i32
    return %arg0, %c0_i32 : i32, i32
  }
  func.func @transform_2(%arg0: i32) -> (i32, i32) {
    %c0_i32 = arith.constant 0 : i32
    %c0_i32_0 = arith.constant 0 : i32
    %c0_i32_1 = arith.constant 0 : i32
    return %c0_i32, %c0_i32_0 : i32, i32
  }
  func.func @transform_3(%arg0: i32) -> (i32, i32) {
    %c0_i32 = arith.constant 0 : i32
    %c0_i32_0 = arith.constant 0 : i32
    %c0_i32_1 = arith.constant 0 : i32
    return %c0_i32, %c0_i32_0 : i32, i32
  }
  func.func @transform_4(%arg0: i32) -> (i32, i32, i32) {
    %c0_i32 = arith.constant 0 : i32
    %c0_i32_0 = arith.constant 0 : i32
    %c0_i32_1 = arith.constant 0 : i32
    return %arg0, %c0_i32, %c0_i32_0 : i32, i32, i32
  }
}

</mosaic_0001>

<llo_original>
// kernel: setconv_forward.1
$region0: #{setconv_forward.1}
  #allocation0 [shape = 'u32[]', space=smem, size = 0x4, offset = 0x4, fixed_abs, tag = 'smem constant byte address 0x4 - core index']
  #allocation1 [shape = 'u32[144,128]{1,0:T(1,128)}', space=vmem, size = 0x12000, scoped, tag = 'internal scratch']
  %s0 = inlined_call_operand.vmem [shape: f32[8,8,48], index: 0, kind: input, shape index: {}]
  %s1 = inlined_call_operand.vmem [shape: f32[8,24], index: 1, kind: input, shape index: {}]
  %s2 = inlined_call_operand.vmem [shape: f32[176,160], index: 2, kind: input, shape index: {}]
  %s3 = inlined_call_operand.vmem [shape: f32[5,128], index: 3, kind: input, shape index: {}]
  %s4 = inlined_call_operand.vmem [shape: f32[1,1,8], index: 4, kind: output, shape index: {}]
  %s5 = sld [smem:[#allocation0]]
  $region26: #{setconv_forward.1} parent=0
    _
  %s7 = ssub.s32 1, %s5
  %s8 = scalar_select 0, %s7, %s5
  // Predicated region
  $region2: #{setconv_forward.1} parent=0 // pred_check
    _
  $region3: #{setconv_forward.1} parent=0 // pred_check_branch
    %10 = sbr.rel (0) target = $region5
  $region4: #{setconv_forward.1} parent=0 // pred_region
    _
  $region5: #{setconv_forward.1} parent=0 // pred_fallthru
    _
  // Predicated region
  $region6: #{setconv_forward.1} parent=0 // pred_check
    _
  $region7: #{setconv_forward.1} parent=0 // pred_check_branch
    %12 = sbr.rel (0) target = $region9
  $region8: #{setconv_forward.1} parent=0 // pred_region
    _
  $region9: #{setconv_forward.1} parent=0 // pred_fallthru
    _
  // Predicated region
  $region10: #{setconv_forward.1} parent=0 // pred_check
    _
  $region11: #{setconv_forward.1} parent=0 // pred_check_branch
    %14 = sbr.rel (0) target = $region13
  $region12: #{setconv_forward.1} parent=0 // pred_region
    _
  $region13: #{setconv_forward.1} parent=0 // pred_fallthru
    _
  // Predicated region
  $region14: #{setconv_forward.1} parent=0 // pred_check
    _
  $region15: #{setconv_forward.1} parent=0 // pred_check_branch
    %16 = sbr.rel (0) target = $region17
  $region16: #{setconv_forward.1} parent=0 // pred_region
    _
  $region17: #{setconv_forward.1} parent=0 // pred_fallthru
    _
  %v17 = vld [vmem:[%s2] sm:$0xff]
  %v18 = vld [vmem:[%s2 + $0x10] sm:$0xff]
  %v19 = vld [vmem:[%s2 + $0x20] sm:$0xff]
  %v20 = vld [vmem:[%s2 + $0x30] sm:$0xff]
  %v21 = vld [vmem:[%s2 + $0x40] sm:$0xff]
  %v22 = vld [vmem:[%s2 + $0x50] sm:$0xff]
  %v23 = vld [vmem:[%s2 + $0x60] sm:$0xff]
  %v24 = vld [vmem:[%s2 + $0x70] sm:$0xff]
  %v25 = vld [vmem:[%s2 + $0x80] sm:$0xff]
  %v26 = vld [vmem:[%s2 + $0x90] sm:$0xff]
  %v27 = vld [vmem:[%s2 + $0xa0] sm:$0xff]
  %v28 = vld [vmem:[%s2 + $0xb0] sm:$0xff]
  %v29 = vld [vmem:[%s2 + $0xc0] sm:$0xff]
  %v30 = vld [vmem:[%s2 + $0xd0] sm:$0xff]
  %v31 = vld [vmem:[%s2 + $0xe0] sm:$0xff]
  %v32 = vld [vmem:[%s2 + $0xf0] sm:$0xff]
  %v33 = vld [vmem:[%s2 + $0x100] sm:$0xff]
  %v34 = vld [vmem:[%s2 + $0x110] sm:$0xff]
  %v35 = vld [vmem:[%s2 + $0x120] sm:$0xff]
  %v36 = vld [vmem:[%s2 + $0x130] sm:$0xff]
  %v37 = vld [vmem:[%s2 + $0x140] sm:$0xff]
  %v38 = vld [vmem:[%s2 + $0x150] sm:$0xff]
  %v39 = vld [vmem:[%s2 + $0x68] sm:$0xff]
  %v40 = vld [vmem:[%s2 + $0x78] sm:$0xff]
  %v41 = vld [vmem:[%s2 + $0x88] sm:$0xff]
  %v42 = vld [vmem:[%s2 + $0x98] sm:$0xff]
  %v43 = vld [vmem:[%s2 + $0xa8] sm:$0xff]
  %v44 = vld [vmem:[%s2 + $0xb8] sm:$0xff]
  %v45 = vld [vmem:[%s2 + $0xc8] sm:$0xff]
  %v46 = vld [vmem:[%s2 + $0xd8] sm:$0xff]
  %v47 = vld [vmem:[%s2 + $0xe8] sm:$0xff]
  %v48 = vld [vmem:[%s2 + $0xf8] sm:$0xff]
  %v49 = vld [vmem:[%s2 + $0x108] sm:$0xff]
  %v50 = vld [vmem:[%s2 + $0x118] sm:$0xff]
  %v51 = vld [vmem:[%s2 + $0x128] sm:$0xff]
  %v52 = vld [vmem:[%s2 + $0x138] sm:$0xff]
  %v53 = vld [vmem:[%s2 + $0x148] sm:$0xff]
  %v54 = vld [vmem:[%s2 + $0x158] sm:$0xff]
  %v55 = vld [vmem:[%s3] sm:$0x1]
  %v56 = vld [vmem:[%s3 + $0x1] sm:$0x1]
  %v57 = vld [vmem:[%s3 + $0x2] sm:$0x1]
  %v58 = vld [vmem:[%s3 + $0x3] sm:$0x1]
  %v59 = vld [vmem:[%s3 + $0x4] sm:$0x1]
  %v60 = vld [vmem:[%s0] sm:$0xff]
  %v61 = vld [vmem:[%s0 + $0x8] sm:$0xff]
  %v62 = vld [vmem:[%s0 + $0x10] sm:$0xff]
  %v63 = vld [vmem:[%s0 + $0x18] sm:$0xff]
  %v64 = vld [vmem:[%s0 + $0x20] sm:$0xff]
  %v65 = vld [vmem:[%s0 + $0x28] sm:$0xff]
  %v66 = vld [vmem:[%s0 + $0x30] sm:$0xff]
  %v67 = vld [vmem:[%s0 + $0x38] sm:$0xff]
  %v68 = vlaneseq
  %v69 = vshrl.u32 %v68, 7
  %v70 = vsub.s32 0, %v69
  %v71 = vrot.slane %v55, %v70
  %vm72 = vcmask 392192
  %v74 = vsel %vm72, %v60, 0
  %v77 = vsel %vm72, %v61, 0
  %v80 = vsel %vm72, %v62, 0
  %v83 = vsel %vm72, %v63, 0
  %v86 = vsel %vm72, %v64, 0
  %v89 = vsel %vm72, %v65, 0
  %v92 = vsel %vm72, %v66, 0
  %v95 = vsel %vm72, %v67, 0
  %97 = vmatprep.subr.mxu0 0.0
  %98 = vmatpush1.msra.mxu0 %v17
  %99 = vmatprep.subr.mxu0 0.0
  %100 = vmatpush1.msra.mxu0 %v18
  %101 = vmatprep.subr.mxu0 0.0
  %102 = vmatpush1.msra.mxu0 %v19
  %103 = vmatprep.subr.mxu0 0.0
  %104 = vmatpush1.msra.mxu0 %v20
  %105 = vmatprep.subr.mxu0 0.0
  %106 = vmatpush1.msra.mxu0 %v21
  %107 = vmatprep.subr.mxu0 0.0
  %108 = vmatpush1.msra.mxu0 %v22
  %109 = vmatprep.subr.mxu0 0.0
  %110 = vmatpush1.msra.mxu0 0.0
  %111 = vmatprep.subr.mxu0 0.0
  %112 = vmatpush1.msra.mxu0 0.0
  %113 = vmatprep.subr.mxu0 0.0
  %114 = vmatpush1.msra.mxu0 0.0
  %115 = vmatprep.subr.mxu0 0.0
  %116 = vmatpush1.msra.mxu0 0.0
  %117 = vmatprep.subr.mxu0 0.0
  %118 = vmatpush1.msra.mxu0 0.0
  %119 = vmatprep.subr.mxu0 0.0
  %120 = vmatpush1.msra.mxu0 0.0
  %121 = vmatprep.subr.mxu0 0.0
  %122 = vmatpush1.msra.mxu0 0.0
  %123 = vmatprep.subr.mxu0 0.0
  %124 = vmatpush1.msra.mxu0 0.0
  %125 = vmatprep.subr.mxu0 0.0
  %126 = vmatpush1.msra.mxu0 0.0
  %127 = vmatprep.subr.mxu0 0.0
  %128 = vmatpush1.msra.mxu0 0.0
  %129 = vmatprep.subr.mxu0 0.0
  %130 = vmatpush1.msra.mxu0 0.0
  %131 = vmatprep.subr.mxu0 0.0
  %132 = vmatpush1.msra.mxu0 0.0
  %133 = vmatprep.subr.mxu0 0.0
  %134 = vmatpush1.msra.mxu0 0.0
  %135 = vmatprep.subr.mxu0 0.0
  %136 = vmatpush1.msra.mxu0 0.0
  %137 = vmatprep.subr.mxu0 0.0
  %138 = vmatpush1.msra.mxu0 0.0
  %139 = vmatprep.subr.mxu0 0.0
  %140 = vmatpush1.msra.mxu0 0.0
  %141 = vmatprep.subr.mxu0 0.0
  %142 = vmatpush1.msra.mxu0 0.0
  %143 = vmatprep.subr.mxu0 0.0
  %144 = vmatpush1.msra.mxu0 0.0
  %145 = vmatprep.subr.mxu0 0.0
  %146 = vmatpush1.msra.mxu0 0.0
  %147 = vmatprep.subr.mxu0 0.0
  %148 = vmatpush1.msra.mxu0 0.0
  %149 = vmatprep.subr.mxu0 0.0
  %150 = vmatpush1.msra.mxu0 0.0
  %151 = vmatprep.subr.mxu0 0.0
  %152 = vmatpush1.msra.mxu0 0.0
  %153 = vmatprep.subr.mxu0 0.0
  %154 = vmatpush1.msra.mxu0 0.0
  %155 = vmatprep.subr.mxu0 0.0
  %156 = vmatpush1.msra.mxu0 0.0
  %157 = vmatprep.subr.mxu0 0.0
  %158 = vmatpush1.msra.mxu0 0.0
  %159 = vmatprep.subr.mxu0 0.0
  %160 = vmatpush1.msra.mxu0 0.0
  %161 = vmatprep.mubr.f32.mxu0 0.0
  %162 = vmatmul.mubr.f32.gmra.mrb[0].mxu0 %v74
  %v163 = vpop.f32.mrb[0].mxu0
  %v164 = vadd.f32 %v71, %v163
  %v165 = vpop.f32.mrb[0].mxu0
  %166 = vmatprep.mubr.f32.mxu0 0.0
  %167 = vmatmul.mubr.f32.gmra.mrb[0].mxu0 %v77
  %v168 = vpop.f32.mrb[0].mxu0
  %v169 = vadd.f32 %v71, %v168
  %v170 = vpop.f32.mrb[0].mxu0
  %171 = vmatprep.mubr.f32.mxu0 0.0
  %172 = vmatmul.mubr.f32.gmra.mrb[0].mxu0 %v80
  %v173 = vpop.f32.mrb[0].mxu0
  %v174 = vadd.f32 %v71, %v173
  %v175 = vpop.f32.mrb[0].mxu0
  %176 = vmatprep.mubr.f32.mxu0 0.0
  %177 = vmatmul.mubr.f32.gmra.mrb[0].mxu0 %v83
  %v178 = vpop.f32.mrb[0].mxu0
  %v179 = vadd.f32 %v71, %v178
  %v180 = vpop.f32.mrb[0].mxu0
  %181 = vmatprep.mubr.f32.mxu0 0.0
  %182 = vmatmul.mubr.f32.gmra.mrb[0].mxu0 %v86
  %v183 = vpop.f32.mrb[0].mxu0
  %v184 = vadd.f32 %v71, %v183
  %v185 = vpop.f32.mrb[0].mxu0
  %186 = vmatprep.mubr.f32.mxu0 0.0
  %187 = vmatmul.mubr.f32.gmra.mrb[0].mxu0 %v89
  %v188 = vpop.f32.mrb[0].mxu0
  %v189 = vadd.f32 %v71, %v188
  %v190 = vpop.f32.mrb[0].mxu0
  %191 = vmatprep.mubr.f32.mxu0 0.0
  %192 = vmatmul.mubr.f32.gmra.mrb[0].mxu0 %v92
  %v193 = vpop.f32.mrb[0].mxu0
  %v194 = vadd.f32 %v71, %v193
  %v195 = vpop.f32.mrb[0].mxu0
  %196 = vmatprep.mubr.f32.mxu0 0.0
  %197 = vmatmul.mubr.f32.gmra.mrb[0].mxu0 %v95
  %v198 = vpop.f32.mrb[0].mxu0
  %v199 = vadd.f32 %v71, %v198
  %v200 = vpop.f32.mrb[0].mxu0
  %201 = vdwg.mxu0
  %v202 = vmax.f32 %v164, 0.0
  %v203 = vmax.f32 %v169, 0.0
  %v204 = vmax.f32 %v174, 0.0
  %v205 = vmax.f32 %v179, 0.0
  %v206 = vmax.f32 %v184, 0.0
  %v207 = vmax.f32 %v189, 0.0
  %v208 = vmax.f32 %v194, 0.0
  %v209 = vmax.f32 %v199, 0.0
  %v210 = vlaneseq
  %v211 = vshrl.u32 %v210, 7
  %v212 = vsub.s32 0, %v211
  %v213 = vrot.slane %v56, %v212
  %214 = vmatprep.subr.mxu0 0.0
  %215 = vmatpush1.msra.mxu0 %v23
  %216 = vmatprep.subr.mxu0 0.0
  %217 = vmatpush1.msra.mxu0 %v24
  %218 = vmatprep.subr.mxu0 0.0
  %219 = vmatpush1.msra.mxu0 %v25
  %220 = vmatprep.subr.mxu0 0.0
  %221 = vmatpush1.msra.mxu0 %v26
  %222 = vmatprep.subr.mxu0 0.0
  %223 = vmatpush1.msra.mxu0 %v27
  %224 = vmatprep.subr.mxu0 0.0
  %225 = vmatpush1.msra.mxu0 %v28
  %226 = vmatprep.subr.mxu0 0.0
  %227 = vmatpush1.msra.mxu0 %v29
  %228 = vmatprep.subr.mxu0 0.0
  %229 = vmatpush1.msra.mxu0 %v30
  %230 = vmatprep.subr.mxu0 0.0
  %231 = vmatpush1.msra.mxu0 %v31
  %232 = vmatprep.subr.mxu0 0.0
  %233 = vmatpush1.msra.mxu0 %v32
  %234 = vmatprep.subr.mxu0 0.0
  %235 = vmatpush1.msra.mxu0 %v33
  %236 = vmatprep.subr.mxu0 0.0
  %237 = vmatpush1.msra.mxu0 %v34
  %238 = vmatprep.subr.mxu0 0.0
  %239 = vmatpush1.msra.mxu0 %v35
  %240 = vmatprep.subr.mxu0 0.0
  %241 = vmatpush1.msra.mxu0 %v36
  %242 = vmatprep.subr.mxu0 0.0
  %243 = vmatpush1.msra.mxu0 %v37
  %244 = vmatprep.subr.mxu0 0.0
  %245 = vmatpush1.msra.mxu0 %v38
  %246 = vmatprep.subr.mxu0 0.0
  %247 = vmatpush1.msra.mxu0 0.0
  %248 = vmatprep.subr.mxu0 0.0
  %249 = vmatpush1.msra.mxu0 0.0
  %250 = vmatprep.subr.mxu0 0.0
  %251 = vmatpush1.msra.mxu0 0.0
  %252 = vmatprep.subr.mxu0 0.0
  %253 = vmatpush1.msra.mxu0 0.0
  %254 = vmatprep.subr.mxu0 0.0
  %255 = vmatpush1.msra.mxu0 0.0
  %256 = vmatprep.subr.mxu0 0.0
  %257 = vmatpush1.msra.mxu0 0.0
  %258 = vmatprep.subr.mxu0 0.0
  %259 = vmatpush1.msra.mxu0 0.0
  %260 = vmatprep.subr.mxu0 0.0
  %261 = vmatpush1.msra.mxu0 0.0
  %262 = vmatprep.subr.mxu0 0.0
  %263 = vmatpush1.msra.mxu0 0.0
  %264 = vmatprep.subr.mxu0 0.0
  %265 = vmatpush1.msra.mxu0 0.0
  %266 = vmatprep.subr.mxu0 0.0
  %267 = vmatpush1.msra.mxu0 0.0
  %268 = vmatprep.subr.mxu0 0.0
  %269 = vmatpush1.msra.mxu0 0.0
  %270 = vmatprep.subr.mxu0 0.0
  %271 = vmatpush1.msra.mxu0 0.0
  %272 = vmatprep.subr.mxu0 0.0
  %273 = vmatpush1.msra.mxu0 0.0
  %274 = vmatprep.subr.mxu0 0.0
  %275 = vmatpush1.msra.mxu0 0.0
  %276 = vmatprep.subr.mxu0 0.0
  %277 = vmatpush1.msra.mxu0 0.0
  %278 = vmatprep.mubr.f32.mxu0 0.0
  %279 = vmatmul.mubr.f32.gmra.mrb[0].mxu0 %v202
  %v280 = vpop.f32.mrb[0].mxu0
  %v281 = vadd.f32 %v213, %v280
  %v282 = vpop.f32.mrb[0].mxu0
  %283 = vmatprep.mubr.f32.mxu0 0.0
  %284 = vmatmul.mubr.f32.gmra.mrb[0].mxu0 %v203
  %v285 = vpop.f32.mrb[0].mxu0
  %v286 = vadd.f32 %v213, %v285
  %v287 = vpop.f32.mrb[0].mxu0
  %288 = vmatprep.mubr.f32.mxu0 0.0
  %289 = vmatmul.mubr.f32.gmra.mrb[0].mxu0 %v204
  %v290 = vpop.f32.mrb[0].mxu0
  %v291 = vadd.f32 %v213, %v290
  %v292 = vpop.f32.mrb[0].mxu0
  %293 = vmatprep.mubr.f32.mxu0 0.0
  %294 = vmatmul.mubr.f32.gmra.mrb[0].mxu0 %v205
  %v295 = vpop.f32.mrb[0].mxu0
  %v296 = vadd.f32 %v213, %v295
  %v297 = vpop.f32.mrb[0].mxu0
  %298 = vmatprep.mubr.f32.mxu0 0.0
  %299 = vmatmul.mubr.f32.gmra.mrb[0].mxu0 %v206
  %v300 = vpop.f32.mrb[0].mxu0
  %v301 = vadd.f32 %v213, %v300
  %v302 = vpop.f32.mrb[0].mxu0
  %303 = vmatprep.mubr.f32.mxu0 0.0
  %304 = vmatmul.mubr.f32.gmra.mrb[0].mxu0 %v207
  %v305 = vpop.f32.mrb[0].mxu0
  %v306 = vadd.f32 %v213, %v305
  %v307 = vpop.f32.mrb[0].mxu0
  %308 = vmatprep.mubr.f32.mxu0 0.0
  %309 = vmatmul.mubr.f32.gmra.mrb[0].mxu0 %v208
  %v310 = vpop.f32.mrb[0].mxu0
  %v311 = vadd.f32 %v213, %v310
  %v312 = vpop.f32.mrb[0].mxu0
  %313 = vmatprep.mubr.f32.mxu0 0.0
  %314 = vmatmul.mubr.f32.gmra.mrb[0].mxu0 %v209
  %v315 = vpop.f32.mrb[0].mxu0
  %v316 = vadd.f32 %v213, %v315
  %v317 = vpop.f32.mrb[0].mxu0
  %318 = vdwg.mxu0
  %v319 = vmax.f32 %v281, 0.0
  %v320 = vmax.f32 %v286, 0.0
  %v321 = vmax.f32 %v291, 0.0
  %v322 = vmax.f32 %v296, 0.0
  %v323 = vmax.f32 %v301, 0.0
  %v324 = vmax.f32 %v306, 0.0
  %v325 = vmax.f32 %v311, 0.0
  %v326 = vmax.f32 %v316, 0.0
  %v327 = vld [vmem:[%s1] sm:$0xff]
  %v328 = vlaneseq
  %v329 = vshrl.u32 %v328, 7
  %v330 = vsub.s32 0, %v329
  %v331 = vrot.slane %v327, %v330
  %333 = vbcast.lane.b32.xlu0 %v331, 256
  %v334 = vpop.permute.xlu0 %333
  %s336 = sor.u32 256, 8
  %337 = vbcast.lane.b32.xlu0 %v331, %s336
  %v338 = vpop.permute.xlu0 %337
  %s340 = sor.u32 256, 16
  %341 = vbcast.lane.b32.xlu0 %v331, %s340
  %v342 = vpop.permute.xlu0 %341
  %v343 = vlaneseq
  %v344 = vshrl.u32 %v343, 7
  %v345 = vsub.s32 1, %v344
  %v346 = vrot.slane %v327, %v345
  %348 = vbcast.lane.b32.xlu0 %v346, 256
  %v349 = vpop.permute.xlu0 %348
  %s351 = sor.u32 256, 8
  %352 = vbcast.lane.b32.xlu0 %v346, %s351
  %v353 = vpop.permute.xlu0 %352
  %s355 = sor.u32 256, 16
  %356 = vbcast.lane.b32.xlu0 %v346, %s355
  %v357 = vpop.permute.xlu0 %356
  %v358 = vlaneseq
  %v359 = vshrl.u32 %v358, 7
  %v360 = vsub.s32 2, %v359
  %v361 = vrot.slane %v327, %v360
  %363 = vbcast.lane.b32.xlu0 %v361, 256
  %v364 = vpop.permute.xlu0 %363
  %s366 = sor.u32 256, 8
  %367 = vbcast.lane.b32.xlu0 %v361, %s366
  %v368 = vpop.permute.xlu0 %367
  %s370 = sor.u32 256, 16
  %371 = vbcast.lane.b32.xlu0 %v361, %s370
  %v372 = vpop.permute.xlu0 %371
  %v373 = vlaneseq
  %v374 = vshrl.u32 %v373, 7
  %v375 = vsub.s32 3, %v374
  %v376 = vrot.slane %v327, %v375
  %378 = vbcast.lane.b32.xlu0 %v376, 256
  %v379 = vpop.permute.xlu0 %378
  %s381 = sor.u32 256, 8
  %382 = vbcast.lane.b32.xlu0 %v376, %s381
  %v383 = vpop.permute.xlu0 %382
  %s385 = sor.u32 256, 16
  %386 = vbcast.lane.b32.xlu0 %v376, %s385
  %v387 = vpop.permute.xlu0 %386
  %v388 = vlaneseq
  %v389 = vshrl.u32 %v388, 7
  %v390 = vsub.s32 4, %v389
  %v391 = vrot.slane %v327, %v390
  %393 = vbcast.lane.b32.xlu0 %v391, 256
  %v394 = vpop.permute.xlu0 %393
  %s396 = sor.u32 256, 8
  %397 = vbcast.lane.b32.xlu0 %v391, %s396
  %v398 = vpop.permute.xlu0 %397
  %s400 = sor.u32 256, 16
  %401 = vbcast.lane.b32.xlu0 %v391, %s400
  %v402 = vpop.permute.xlu0 %401
  %v403 = vlaneseq
  %v404 = vshrl.u32 %v403, 7
  %v405 = vsub.s32 5, %v404
  %v406 = vrot.slane %v327, %v405
  %408 = vbcast.lane.b32.xlu0 %v406, 256
  %v409 = vpop.permute.xlu0 %408
  %s411 = sor.u32 256, 8
  %412 = vbcast.lane.b32.xlu0 %v406, %s411
  %v413 = vpop.permute.xlu0 %412
  %s415 = sor.u32 256, 16
  %416 = vbcast.lane.b32.xlu0 %v406, %s415
  %v417 = vpop.permute.xlu0 %416
  %v418 = vlaneseq
  %v419 = vshrl.u32 %v418, 7
  %v420 = vsub.s32 6, %v419
  %v421 = vrot.slane %v327, %v420
  %423 = vbcast.lane.b32.xlu0 %v421, 256
  %v424 = vpop.permute.xlu0 %423
  %s426 = sor.u32 256, 8
  %427 = vbcast.lane.b32.xlu0 %v421, %s426
  %v428 = vpop.permute.xlu0 %427
  %s430 = sor.u32 256, 16
  %431 = vbcast.lane.b32.xlu0 %v421, %s430
  %v432 = vpop.permute.xlu0 %431
  %v433 = vlaneseq
  %v434 = vshrl.u32 %v433, 7
  %v435 = vsub.s32 7, %v434
  %v436 = vrot.slane %v327, %v435
  %438 = vbcast.lane.b32.xlu0 %v436, 256
  %v439 = vpop.permute.xlu0 %438
  %s441 = sor.u32 256, 8
  %442 = vbcast.lane.b32.xlu0 %v436, %s441
  %v443 = vpop.permute.xlu0 %442
  %s445 = sor.u32 256, 16
  %446 = vbcast.lane.b32.xlu0 %v436, %s445
  %v447 = vpop.permute.xlu0 %446
  %v448 = vmul.f32 %v319, %v334
  %v449 = vmul.f32 %v320, %v349
  %v450 = vmul.f32 %v321, %v364
  %v451 = vmul.f32 %v322, %v379
  %v452 = vmul.f32 %v323, %v394
  %v453 = vmul.f32 %v324, %v409
  %v454 = vmul.f32 %v325, %v424
  %v455 = vmul.f32 %v326, %v439
  %vm456 = vcmask 261120
  %v457 = vsel %vm456, %v448, 0.0
  %v458 = vrot.slane %v457, 4
  %v459 = vadd.f32 %v457, %v458
  %v460 = vrot.slane %v459, 2
  %v461 = vadd.f32 %v459, %v460
  %v462 = vrot.slane %v461, 1
  %v463 = vadd.f32 %v461, %v462
  %v464 = vsel %vm456, %v449, 0.0
  %v465 = vrot.slane %v464, 4
  %v466 = vadd.f32 %v464, %v465
  %v467 = vrot.slane %v466, 2
  %v468 = vadd.f32 %v466, %v467
  %v469 = vrot.slane %v468, 1
  %v470 = vadd.f32 %v468, %v469
  %v471 = vsel %vm456, %v450, 0.0
  %v472 = vrot.slane %v471, 4
  %v473 = vadd.f32 %v471, %v472
  %v474 = vrot.slane %v473, 2
  %v475 = vadd.f32 %v473, %v474
  %v476 = vrot.slane %v475, 1
  %v477 = vadd.f32 %v475, %v476
  %v478 = vsel %vm456, %v451, 0.0
  %v479 = vrot.slane %v478, 4
  %v480 = vadd.f32 %v478, %v479
  %v481 = vrot.slane %v480, 2
  %v482 = vadd.f32 %v480, %v481
  %v483 = vrot.slane %v482, 1
  %v484 = vadd.f32 %v482, %v483
  %v485 = vsel %vm456, %v452, 0.0
  %v486 = vrot.slane %v485, 4
  %v487 = vadd.f32 %v485, %v486
  %v488 = vrot.slane %v487, 2
  %v489 = vadd.f32 %v487, %v488
  %v490 = vrot.slane %v489, 1
  %v491 = vadd.f32 %v489, %v490
  %v492 = vsel %vm456, %v453, 0.0
  %v493 = vrot.slane %v492, 4
  %v494 = vadd.f32 %v492, %v493
  %v495 = vrot.slane %v494, 2
  %v496 = vadd.f32 %v494, %v495
  %v497 = vrot.slane %v496, 1
  %v498 = vadd.f32 %v496, %v497
  %v499 = vsel %vm456, %v454, 0.0
  %v500 = vrot.slane %v499, 4
  %v501 = vadd.f32 %v499, %v500
  %v502 = vrot.slane %v501, 2
  %v503 = vadd.f32 %v501, %v502
  %v504 = vrot.slane %v503, 1
  %v505 = vadd.f32 %v503, %v504
  %v506 = vsel %vm456, %v455, 0.0
  %v507 = vrot.slane %v506, 4
  %v508 = vadd.f32 %v506, %v507
  %v509 = vrot.slane %v508, 2
  %v510 = vadd.f32 %v508, %v509
  %v511 = vrot.slane %v510, 1
  %v512 = vadd.f32 %v510, %v511
  %v513 = vmul.f32 %v319, %v338
  %v514 = vmul.f32 %v320, %v353
  %v515 = vmul.f32 %v321, %v368
  %v516 = vmul.f32 %v322, %v383
  %v517 = vmul.f32 %v323, %v398
  %v518 = vmul.f32 %v324, %v413
  %v519 = vmul.f32 %v325, %v428
  %v520 = vmul.f32 %v326, %v443
  %vm521 = vcmask 523520
  %v522 = vsel %vm521, %v513, 0.0
  %v523 = vrot.slane %v522, 4
  %v524 = vadd.f32 %v522, %v523
  %v525 = vrot.slane %v524, 2
  %v526 = vadd.f32 %v524, %v525
  %v527 = vrot.slane %v526, 1
  %v528 = vadd.f32 %v526, %v527
  %v529 = vsel %vm521, %v514, 0.0
  %v530 = vrot.slane %v529, 4
  %v531 = vadd.f32 %v529, %v530
  %v532 = vrot.slane %v531, 2
  %v533 = vadd.f32 %v531, %v532
  %v534 = vrot.slane %v533, 1
  %v535 = vadd.f32 %v533, %v534
  %v536 = vsel %vm521, %v515, 0.0
  %v537 = vrot.slane %v536, 4
  %v538 = vadd.f32 %v536, %v537
  %v539 = vrot.slane %v538, 2
  %v540 = vadd.f32 %v538, %v539
  %v541 = vrot.slane %v540, 1
  %v542 = vadd.f32 %v540, %v541
  %v543 = vsel %vm521, %v516, 0.0
  %v544 = vrot.slane %v543, 4
  %v545 = vadd.f32 %v543, %v544
  %v546 = vrot.slane %v545, 2
  %v547 = vadd.f32 %v545, %v546
  %v548 = vrot.slane %v547, 1
  %v549 = vadd.f32 %v547, %v548
  %v550 = vsel %vm521, %v517, 0.0
  %v551 = vrot.slane %v550, 4
  %v552 = vadd.f32 %v550, %v551
  %v553 = vrot.slane %v552, 2
  %v554 = vadd.f32 %v552, %v553
  %v555 = vrot.slane %v554, 1
  %v556 = vadd.f32 %v554, %v555
  %v557 = vsel %vm521, %v518, 0.0
  %v558 = vrot.slane %v557, 4
  %v559 = vadd.f32 %v557, %v558
  %v560 = vrot.slane %v559, 2
  %v561 = vadd.f32 %v559, %v560
  %v562 = vrot.slane %v561, 1
  %v563 = vadd.f32 %v561, %v562
  %v564 = vsel %vm521, %v519, 0.0
  %v565 = vrot.slane %v564, 4
  %v566 = vadd.f32 %v564, %v565
  %v567 = vrot.slane %v566, 2
  %v568 = vadd.f32 %v566, %v567
  %v569 = vrot.slane %v568, 1
  %v570 = vadd.f32 %v568, %v569
  %v571 = vsel %vm521, %v520, 0.0
  %v572 = vrot.slane %v571, 4
  %v573 = vadd.f32 %v571, %v572
  %v574 = vrot.slane %v573, 2
  %v575 = vadd.f32 %v573, %v574
  %v576 = vrot.slane %v575, 1
  %v577 = vadd.f32 %v575, %v576
  %v578 = vmul.f32 %v319, %v342
  %v579 = vmul.f32 %v320, %v357
  %v580 = vmul.f32 %v321, %v372
  %v581 = vmul.f32 %v322, %v387
  %v582 = vmul.f32 %v323, %v402
  %v583 = vmul.f32 %v324, %v417
  %v584 = vmul.f32 %v325, %v432
  %v585 = vmul.f32 %v326, %v447
  %vm586 = vcmask 785920
  %v587 = vsel %vm586, %v578, 0.0
  %v588 = vrot.slane %v587, 4
  %v589 = vadd.f32 %v587, %v588
  %v590 = vrot.slane %v589, 2
  %v591 = vadd.f32 %v589, %v590
  %v592 = vrot.slane %v591, 1
  %v593 = vadd.f32 %v591, %v592
  %v594 = vsel %vm586, %v579, 0.0
  %v595 = vrot.slane %v594, 4
  %v596 = vadd.f32 %v594, %v595
  %v597 = vrot.slane %v596, 2
  %v598 = vadd.f32 %v596, %v597
  %v599 = vrot.slane %v598, 1
  %v600 = vadd.f32 %v598, %v599
  %v601 = vsel %vm586, %v580, 0.0
  %v602 = vrot.slane %v601, 4
  %v603 = vadd.f32 %v601, %v602
  %v604 = vrot.slane %v603, 2
  %v605 = vadd.f32 %v603, %v604
  %v606 = vrot.slane %v605, 1
  %v607 = vadd.f32 %v605, %v606
  %v608 = vsel %vm586, %v581, 0.0
  %v609 = vrot.slane %v608, 4
  %v610 = vadd.f32 %v608, %v609
  %v611 = vrot.slane %v610, 2
  %v612 = vadd.f32 %v610, %v611
  %v613 = vrot.slane %v612, 1
  %v614 = vadd.f32 %v612, %v613
  %v615 = vsel %vm586, %v582, 0.0
  %v616 = vrot.slane %v615, 4
  %v617 = vadd.f32 %v615, %v616
  %v618 = vrot.slane %v617, 2
  %v619 = vadd.f32 %v617, %v618
  %v620 = vrot.slane %v619, 1
  %v621 = vadd.f32 %v619, %v620
  %v622 = vsel %vm586, %v583, 0.0
  %v623 = vrot.slane %v622, 4
  %v624 = vadd.f32 %v622, %v623
  %v625 = vrot.slane %v624, 2
  %v626 = vadd.f32 %v624, %v625
  %v627 = vrot.slane %v626, 1
  %v628 = vadd.f32 %v626, %v627
  %v629 = vsel %vm586, %v584, 0.0
  %v630 = vrot.slane %v629, 4
  %v631 = vadd.f32 %v629, %v630
  %v632 = vrot.slane %v631, 2
  %v633 = vadd.f32 %v631, %v632
  %v634 = vrot.slane %v633, 1
  %v635 = vadd.f32 %v633, %v634
  %v636 = vsel %vm586, %v585, 0.0
  %v637 = vrot.slane %v636, 4
  %v638 = vadd.f32 %v636, %v637
  %v639 = vrot.slane %v638, 2
  %v640 = vadd.f32 %v638, %v639
  %v641 = vrot.slane %v640, 1
  %v642 = vadd.f32 %v640, %v641
  %v643 = vadd.f32 %v319, 0.0
  %v644 = vadd.f32 %v320, 0.0
  %v645 = vadd.f32 %v321, 0.0
  %v646 = vadd.f32 %v322, 0.0
  %v647 = vadd.f32 %v323, 0.0
  %v648 = vadd.f32 %v324, 0.0
  %v649 = vadd.f32 %v325, 0.0
  %v650 = vadd.f32 %v326, 0.0
  %vm659 = vcmask 1041409
  %v660 = vsel %vm659, %v470, %v463
  %vm661 = vcmask 1042434
  %v662 = vsel %vm661, %v477, %v660
  %vm663 = vcmask 1043459
  %v664 = vsel %vm663, %v484, %v662
  %vm665 = vcmask 1044484
  %v666 = vsel %vm665, %v491, %v664
  %vm667 = vcmask 1045509
  %v668 = vsel %vm667, %v498, %v666
  %vm669 = vcmask 1046534
  %v670 = vsel %vm669, %v505, %v668
  %vm671 = vcmask 1047559
  %v672 = vsel %vm671, %v512, %v670
  %v682 = vsel %vm659, %v535, %v528
  %v683 = vsel %vm661, %v542, %v682
  %v684 = vsel %vm663, %v549, %v683
  %v685 = vsel %vm665, %v556, %v684
  %v686 = vsel %vm667, %v563, %v685
  %v687 = vsel %vm669, %v570, %v686
  %v688 = vsel %vm671, %v577, %v687
  %v698 = vsel %vm659, %v600, %v593
  %v699 = vsel %vm661, %v607, %v698
  %v700 = vsel %vm663, %v614, %v699
  %v701 = vsel %vm665, %v621, %v700
  %v702 = vsel %vm667, %v628, %v701
  %v703 = vsel %vm669, %v635, %v702
  %v704 = vsel %vm671, %v642, %v703
  %v714 = vrot.slane %v644, 7
  %v715 = vsel %vm659, %v714, %v643
  %v716 = vrot.slane %v645, 6
  %v717 = vsel %vm661, %v716, %v715
  %v718 = vrot.slane %v646, 5
  %v719 = vsel %vm663, %v718, %v717
  %v720 = vrot.slane %v647, 4
  %v721 = vsel %vm665, %v720, %v719
  %v722 = vrot.slane %v648, 3
  %v723 = vsel %vm667, %v722, %v721
  %v724 = vrot.slane %v649, 2
  %v725 = vsel %vm669, %v724, %v723
  %v726 = vrot.slane %v650, 1
  %v727 = vsel %vm671, %v726, %v725
  %v729 = vsel %vm456, %v672, %v688
  %vm730 = vcmask 523264
  %v731 = vsel %vm730, %v729, %v704
  %vm732 = vcmask 785408
  %v733 = vsel %vm732, %v731, %v727
  %v734 = vlaneseq
  %v735 = vshrl.u32 %v734, 7
  %v736 = vsub.s32 0, %v735
  %v737 = vrot.slane %v57, %v736
  %738 = vmatprep.subr.mxu0 0.0
  %739 = vmatpush1.msra.mxu0 %v39
  %740 = vmatprep.subr.mxu0 0.0
  %741 = vmatpush1.msra.mxu0 %v40
  %742 = vmatprep.subr.mxu0 0.0
  %743 = vmatpush1.msra.mxu0 %v41
  %744 = vmatprep.subr.mxu0 0.0
  %745 = vmatpush1.msra.mxu0 %v42
  %746 = vmatprep.subr.mxu0 0.0
  %747 = vmatpush1.msra.mxu0 %v43
  %748 = vmatprep.subr.mxu0 0.0
  %749 = vmatpush1.msra.mxu0 %v44
  %750 = vmatprep.subr.mxu0 0.0
  %751 = vmatpush1.msra.mxu0 %v45
  %752 = vmatprep.subr.mxu0 0.0
  %753 = vmatpush1.msra.mxu0 %v46
  %754 = vmatprep.subr.mxu0 0.0
  %755 = vmatpush1.msra.mxu0 %v47
  %756 = vmatprep.subr.mxu0 0.0
  %757 = vmatpush1.msra.mxu0 %v48
  %758 = vmatprep.subr.mxu0 0.0
  %759 = vmatpush1.msra.mxu0 %v49
  %760 = vmatprep.subr.mxu0 0.0
  %761 = vmatpush1.msra.mxu0 %v50
  %762 = vmatprep.subr.mxu0 0.0
  %763 = vmatpush1.msra.mxu0 %v51
  %764 = vmatprep.subr.mxu0 0.0
  %765 = vmatpush1.msra.mxu0 %v52
  %766 = vmatprep.subr.mxu0 0.0
  %767 = vmatpush1.msra.mxu0 %v53
  %768 = vmatprep.subr.mxu0 0.0
  %769 = vmatpush1.msra.mxu0 %v54
  %770 = vmatprep.subr.mxu0 0.0
  %771 = vmatpush1.msra.mxu0 0.0
  %772 = vmatprep.subr.mxu0 0.0
  %773 = vmatpush1.msra.mxu0 0.0
  %774 = vmatprep.subr.mxu0 0.0
  %775 = vmatpush1.msra.mxu0 0.0
  %776 = vmatprep.subr.mxu0 0.0
  %777 = vmatpush1.msra.mxu0 0.0
  %778 = vmatprep.subr.mxu0 0.0
  %779 = vmatpush1.msra.mxu0 0.0
  %780 = vmatprep.subr.mxu0 0.0
  %781 = vmatpush1.msra.mxu0 0.0
  %782 = vmatprep.subr.mxu0 0.0
  %783 = vmatpush1.msra.mxu0 0.0
  %784 = vmatprep.subr.mxu0 0.0
  %785 = vmatpush1.msra.mxu0 0.0
  %786 = vmatprep.subr.mxu0 0.0
  %787 = vmatpush1.msra.mxu0 0.0
  %788 = vmatprep.subr.mxu0 0.0
  %789 = vmatpush1.msra.mxu0 0.0
  %790 = vmatprep.subr.mxu0 0.0
  %791 = vmatpush1.msra.mxu0 0.0
  %792 = vmatprep.subr.mxu0 0.0
  %793 = vmatpush1.msra.mxu0 0.0
  %794 = vmatprep.subr.mxu0 0.0
  %795 = vmatpush1.msra.mxu0 0.0
  %796 = vmatprep.subr.mxu0 0.0
  %797 = vmatpush1.msra.mxu0 0.0
  %798 = vmatprep.subr.mxu0 0.0
  %799 = vmatpush1.msra.mxu0 0.0
  %800 = vmatprep.subr.mxu0 0.0
  %801 = vmatpush1.msra.mxu0 0.0
  %802 = vmatprep.mubr.f32.mxu0 0.0
  %803 = vmatmul.mubr.f32.gmra.mrb[0].mxu0 %v733
  %v804 = vpop.f32.mrb[0].mxu0
  %v805 = vadd.f32 %v737, %v804
  %v806 = vpop.f32.mrb[0].mxu0
  %807 = vdwg.mxu0
  %v808 = vmax.f32 %v805, 0.0
  %v809 = vlaneseq
  %v810 = vshrl.u32 %v809, 7
  %v811 = vsub.s32 0, %v810
  %v812 = vrot.slane %v58, %v811
  %v813 = vmul.f32 %v808, %v812
  %v814 = vsel %vm456, %v813, 0.0
  %815 = vadd.xlane.f32.xlu0 %v814
  %v816 = vpop.xlane.xlu0 %815
  %818 = vset.pattern.permute.xlu0 0
  %819 = vperm.xlu0 %818, %v59
  %v820 = vpop.permute.xlu0 %819
  %v821 = vlaneseq
  %v822 = vshrl.u32 %v821, 7
  %v823 = vsub.s32 0, %v822
  %v824 = vrot.slane %v820, %v823
  %v826 = vadd.f32 %v816, %v824
  %v827 = vxor.u32 %v826, 2147483648
  %v828 = vmul.f32 %v827, 1.442695
  %v829 = vpow.pop %v828
  %v830 = vadd.f32 %v829, 1.0
  %v831 = vrcp.pop %v830
  %v832 = vmul.f32 1.0, %v831
  %834 = vset.pattern.permute.xlu0 0
  %835 = vperm.xlu0 %834, %v832
  %v836 = vpop.permute.xlu0 %835
  %v837 = vlaneseq
  %v838 = vand.u32 %v837, 127
  %v839 = vlaneseq
  %v840 = vshrl.u32 %v839, 7
  %v841 = vsub.s32 %v838, %v840
  %v842 = vrot.slane %v836, %v841
  %vm844 = vcmask 57344
  %845 = vst.msk [vmem:[%s4] sm:$0x1] %vm844, %v842
  // Predicated region
  $region18: #{setconv_forward.1} parent=0 // pred_check
    _
  $region19: #{setconv_forward.1} parent=0 // pred_check_branch
    %847 = sbr.rel (0) target = $region21
  $region20: #{setconv_forward.1} parent=0 // pred_region
    _
  $region21: #{setconv_forward.1} parent=0 // pred_fallthru
    _
  // Predicated region
  $region22: #{setconv_forward.1} parent=0 // pred_check
    _
  $region23: #{setconv_forward.1} parent=0 // pred_check_branch
    %849 = sbr.rel (0) target = $region25
  $region24: #{setconv_forward.1} parent=0 // pred_region
    _
  $region25: #{setconv_forward.1} parent=0 // pred_fallthru
    _

</llo_original>
